<compile_context>
chip_gen: v7x
topology: tpu7x:2x2x1
jax: 0.10.0
libtpu: 0.0.40
codegen_flags: <defaults>
</compile_context>

<pallas_src>
import functools

import jax
import jax.numpy as jnp
from jax.experimental import pallas as pl
from jax.experimental.pallas import tpu as pltpu


# ----------------------------- Pallas kernel --------------------------------

def _repmat_kernel(x_ref, o_ref, *, dim):
    # x_ref: (rows, C) VMEM tile; o_ref: (rows, C*dim) VMEM tile.
    # Build the full replicated row-tile in registers (lane-axis concat) and
    # write it with one lane-dense store.
    x = x_ref[...]
    o_ref[...] = jnp.concatenate([x] * dim, axis=-1)


# ----------------------------- wrapper ---------------------------------------

def repmat(x, dim, *, row_block=256):
    """torch `x.repeat(1, dim)` for 2-D x.  x: (B, C) -> (B, C*dim).

    row_block must be a multiple of 8 (sublane alignment); rows are tiled so
    the in/out blocks (double-buffered) stay small relative to VMEM on
    v5e/v6e (128 MiB) and v7x (64 MiB).
    """
    B, C = x.shape
    rb = min(row_block, B)
    grid = (pl.cdiv(B, rb),)
    return pl.pallas_call(
        functools.partial(_repmat_kernel, dim=dim),
        out_shape=jax.ShapeDtypeStruct((B, C * dim), x.dtype),
        grid_spec=pltpu.PrefetchScalarGridSpec(
            num_scalar_prefetch=0,
            grid=grid,
            in_specs=[pl.BlockSpec((rb, C), lambda i: (i, 0))],
            out_specs=pl.BlockSpec((rb, C * dim), lambda i: (i, 0)),
        ),
        compiler_params=pltpu.CompilerParams(
            dimension_semantics=("parallel",)),
    )(x)


# ----------------------------------- main ------------------------------------

if __name__ == "__main__":
    # Small shapes consistent with the module: x is 2-D (batch, features).
    # C * dim = 128 -> the output row tile is exactly one lane-dense vreg row.
    B, C, dim = 16, 32, 4

    key = jax.random.PRNGKey(0)
    x = jax.random.normal(key, (B, C), jnp.float32)

    # row_block=8 gives a grid of (2,) parallel steps (exercises tiling and
    # gives both v7x TensorCores work); each block is an aligned (8, 32) tile.
    fwd = jax.jit(functools.partial(repmat, dim=dim, row_block=8))
    out = jax.block_until_ready(fwd(x))

    ref = jnp.tile(x, (1, dim))  # == torch x.repeat(1, dim)
    assert out.shape == (B, C * dim), out.shape
    assert out.dtype == x.dtype
    assert bool(jnp.all(out == ref))
    print("KERNEL_OK")
</pallas_src>

<mosaic_0001>
module attributes {stable_mosaic.version = 11 : i64} {
  func.func @_repmat_kernel(%arg0: i32, %arg1: memref<8x32xf32, #tpu.memory_space<vmem>>, %arg2: memref<8x128xf32, #tpu.memory_space<vmem>>) attributes {dimension_semantics = [#tpu.dimension_semantics<parallel>], iteration_bounds = array<i64: 2>, scalar_prefetch = 0 : i64, scratch_operands = 0 : i64, tpu.core_type = #tpu.core_type<tc>, window_params = [{transform_indices = @transform_0, window_bounds = array<i64: 8, 32>}, {transform_indices = @transform_1, window_bounds = array<i64: 8, 128>}]} {
    %c0 = arith.constant 0 : index
    %c0_0 = arith.constant 0 : index
    %0 = vector.load %arg1[%c0, %c0_0] : memref<8x32xf32, #tpu.memory_space<vmem>>, vector<8x32xf32>
    %1 = tpu.concatenate %0, %0, %0, %0 in 1 : vector<8x32xf32>, vector<8x32xf32>, vector<8x32xf32>, vector<8x32xf32> -> vector<8x128xf32>
    %c0_1 = arith.constant 0 : index
    %c0_2 = arith.constant 0 : index
    %2 = vector.load %arg2[%c0_1, %c0_2] : memref<8x128xf32, #tpu.memory_space<vmem>>, vector<8x128xf32>
    tpu.vector_store %arg2[%c0_1, %c0_2], %1 {strides = array<i32>} : memref<8x128xf32, #tpu.memory_space<vmem>>, vector<8x128xf32>,
    return
  }
  func.func @transform_0(%arg0: i32) -> (i32, i32) {
    %c0_i32 = arith.constant 0 : i32
    %c0_i32_0 = arith.constant 0 : i32
    return %arg0, %c0_i32 : i32, i32
  }
  func.func @transform_1(%arg0: i32) -> (i32, i32) {
    %c0_i32 = arith.constant 0 : i32
    %c0_i32_0 = arith.constant 0 : i32
    return %arg0, %c0_i32 : i32, i32
  }
}

</mosaic_0001>

<llo_original>
// kernel: repmat.1
$region0: #{repmat.1}
  #allocation0 [shape = 'u32[]', space=smem, size = 0x4, offset = 0x4, fixed_abs, tag = 'smem constant byte address 0x4 - core index']
  #allocation1 [shape = 'u32[144,128]{1,0:T(1,128)}', space=vmem, size = 0x12000, scoped, tag = 'internal scratch']
  %s0 = inlined_call_operand.hbm [shape: f32[16,32], index: 0, kind: input, shape index: {}]
  %s1 = inlined_call_operand.hbm [shape: f32[16,128], index: 1, kind: output, shape index: {}]
  %s2 = sld [smem:[#allocation0]]
  $region41: #{repmat.1} parent=0
    _
  %s4 = ssub.s32 1, %s2
  %s5 = scalar_select 0, %s4, %s2
  $region1: #{repmat.1} parent=0
    #allocation2 [shape = 'u8[8192]{0}', space=vmem, size = 0x2000, scoped, tag = 'input window, operand 0']
    #allocation3 [shape = 's32[2]{0}', space=sflag, size = 0x8, scoped, tag = 'scoped memory for repmat.1']
    #allocation4 [shape = 's32[2]{0}', space=sflag, size = 0x8, scoped, tag = 'scoped memory for repmat.1']
    #allocation5 [shape = 'u8[8192]{0}', space=vmem, size = 0x2000, scoped, tag = 'output window, operand 0']
    %6 = vsyncpa [#allocation3], 0
    %s7 = scalar_lea.sflag [#allocation3], 1
    %8 = vsyncpa %s7, 0
    %9 = vsyncpa [#allocation4], 0
    %s10 = scalar_lea.sflag [#allocation4], 1
    %11 = vsyncpa %s10, 0
    loop: start=0, step=1, limit=4
    $region2: #{repmat.1} parent=1 // loop_pre_header
      _
    $region3: #{repmat.1} parent=1 // loop_header
      %s13 = sphi 0, %s17
      %p14 = scmp.ge.s32.totalorder %s13, 4
      %s23 = sphi 0, %s25
      %s26 = sphi 0, %s23
      %s27 = sphi 0, %s26
      %s43 = sphi 0, %s27
      %s49 = sphi 0, %s51
      %s52 = sphi 0, %s49
      %s53 = sphi 0, %s52
      %s69 = sphi 0, %s53
    $region4: #{repmat.1} parent=1 // loop_header_branch
      %16 = sbr.rel (%p14) target = $region8
    $region5: #{repmat.1} parent=1 // loop_body
      %s18 = ssub.s32 %s13, 1
      %s19 = ssub.s32 %s13, 2
      %s20 = sadd.s32 %s13, 1
      %s21 = ssub.s32 %s13, %s20
      %p22 = scmp.eq.s32.totalorder %s21, 0
      %s24 = sadd.s32 %s23, 1
      %s25 = scalar_select %p22, %s23, %s24
      %p28 = pneg %p22
      %p29 = scmp.eq.s32.totalorder %s13, 1
      %p30 = por %p28, %p29
      %p31 = scmp.ne.s32.totalorder %s23, %s26
      %p32 = scmp.eq.s32.totalorder %s13, 0
      %p33 = por %p31, %p32
      %p34 = scmp.ne.s32.totalorder %s23, %s26
      %p35 = scmp.eq.s32.totalorder %s18, 1
      %p36 = por %p34, %p35
      %p37 = scmp.ne.s32.totalorder %s26, %s27
      %p38 = scmp.eq.s32.totalorder %s18, 0
      %p39 = por %p37, %p38
      %p40 = scmp.ne.s32.totalorder %s26, %s27
      %p41 = scmp.eq.s32.totalorder %s19, 1
      %p42 = por %p40, %p41
      %p44 = scmp.ne.s32.totalorder %s27, %s43
      %p45 = scmp.eq.s32.totalorder %s19, 0
      %p46 = por %p44, %p45
      %s47 = ssub.s32 %s13, %s20
      %p48 = scmp.eq.s32.totalorder %s47, 0
      %s50 = sadd.s32 %s49, 1
      %s51 = scalar_select %p48, %s49, %s50
      %p54 = pneg %p48
      %p55 = scmp.eq.s32.totalorder %s13, 1
      %p56 = por %p54, %p55
      %p57 = scmp.ne.s32.totalorder %s49, %s52
      %p58 = scmp.eq.s32.totalorder %s13, 0
      %p59 = por %p57, %p58
      %p60 = scmp.ne.s32.totalorder %s49, %s52
      %p61 = scmp.eq.s32.totalorder %s18, 1
      %p62 = por %p60, %p61
      %p63 = scmp.ne.s32.totalorder %s52, %s53
      %p64 = scmp.eq.s32.totalorder %s18, 0
      %p65 = por %p63, %p64
      %p66 = scmp.ne.s32.totalorder %s52, %s53
      %p67 = scmp.eq.s32.totalorder %s19, 1
      %p68 = por %p66, %p67
      %p70 = scmp.ne.s32.totalorder %s53, %s69
      %p71 = scmp.eq.s32.totalorder %s19, 0
      %p72 = por %p70, %p71
      %p73 = scmp.le.s32.totalorder 1, %s13
      %p74 = scmp.lt.s32.totalorder %s13, 3
      %p75 = pnand %p73, %p74
      %p76 = pneg %p75
      // Predicated region
      $region9: #{repmat.1} parent=5 // pred_check
        _
      $region10: #{repmat.1} parent=5 // pred_check_branch
        %78 = sbr.rel (%p75) target = $region12
      $region11: #{repmat.1} parent=5 // pred_region
        %s79 = ssub.s32 %s13, 1
      $region12: #{repmat.1} parent=5 // pred_fallthru
        _
      %p80 = scmp.lt.s32.totalorder %s13, 2
      // Predicated region
      $region13: #{repmat.1} parent=5 // pred_check
        %p81 = pneg %p80
      $region14: #{repmat.1} parent=5 // pred_check_branch
        %83 = sbr.rel (%p81) target = $region16
      $region15: #{repmat.1} parent=5 // pred_region
        // Predicated region
        $region17: #{repmat.1} parent=15 // pred_check
          %p84 = pneg %p33
        $region18: #{repmat.1} parent=15 // pred_check_branch
          %86 = sbr.rel (%p84) target = $region20
        $region19: #{repmat.1} parent=15 // pred_region
          %s87 = sand.u32 %s23, 1
          %s88 = scalar_lea.sflag [#allocation3], %s87
          %s89 = sand.u32 %s23, 1
          %s90 = smul.addr %s89, 8
          %s91 = scalar_lea.vmem [#allocation2], %s90
          %s93 = ssub.s32 128, 128
          %94 = vsyncadd %s88, %s93
          %s95 = smul.addr %s13, 128
          %s96 = scalar_lea.hbm %s0, %s95
          %s98 = sshll.u32 %s91, 4
          %s99 = int_to_ptr.vmem [resolvable:$true] %s98
          %101 = dma.hbm_to_vmem [thread:$0]  %s96, 128, %s99, %s88
        $region20: #{repmat.1} parent=15 // pred_fallthru
          _
      $region16: #{repmat.1} parent=5 // pred_fallthru
        _
      %p102 = scmp.le.s32.totalorder 1, %s13
      %p103 = scmp.lt.s32.totalorder %s13, 3
      %p104 = pnand %p102, %p103
      %p105 = pneg %p104
      // Predicated region
      $region21: #{repmat.1} parent=5 // pred_check
        _
      $region22: #{repmat.1} parent=5 // pred_check_branch
        %107 = sbr.rel (%p104) target = $region24
      $region23: #{repmat.1} parent=5 // pred_region
        %s108 = ssub.s32 %s13, 1
        %s109 = sand.u32 %s26, 1
        %s110 = scalar_lea.sflag [#allocation3], %s109
        %s111 = sand.u32 %s26, 1
        %s112 = smul.addr %s111, 8
        %s113 = scalar_lea.vmem [#allocation2], %s112
        // Predicated region
        $region25: #{repmat.1} parent=23 // pred_check
          %p114 = pneg %p39
        $region26: #{repmat.1} parent=23 // pred_check_branch
          %116 = sbr.rel (%p114) target = $region28
        $region27: #{repmat.1} parent=23 // pred_region
          %117 = dma.done %s110, 128
        $region28: #{repmat.1} parent=23 // pred_fallthru
          _
        %s118 = sand.u32 %s26, 1
        %s119 = scalar_lea.sflag [#allocation3], %s118
        %s120 = sand.u32 %s26, 1
        %s121 = smul.addr %s120, 8
        %s122 = scalar_lea.vmem [#allocation2], %s121
        %p123 = pneg %p39
        %p124 = pneg %p36
        %p125 = pneg %p65
        %p126 = pneg %p62
        %s127 = sand.u32 %s52, 1
        %s128 = scalar_lea.sflag [#allocation4], %s127
        %s129 = sand.u32 %s52, 1
        %s130 = smul.addr %s129, 8
        %s131 = scalar_lea.vmem [#allocation5], %s130
        %v132 = vld [vmem:[%s113] sm:$0xff]
        %134 = vrot.lane.b32.xlu0 %v132, 32
        %v135 = vpop.permute.xlu0 %134
        %137 = vrot.lane.b32.xlu0 %v132, 64
        %v138 = vpop.permute.xlu0 %137
        %140 = vrot.lane.b32.xlu0 %v132, 96
        %v141 = vpop.permute.xlu0 %140
        %vm143 = vcmask 261120
        %v144 = vsel %vm143, %v132, %v135
        %vm145 = vcmask 523264
        %v146 = vsel %vm145, %v144, %v138
        %vm147 = vcmask 785408
        %v148 = vsel %vm147, %v146, %v141
        %149 = vst [vmem:[%s131] sm:$0xff] %v148
        %s150 = sand.u32 %s52, 1
        %s151 = scalar_lea.sflag [#allocation4], %s150
        %s152 = sand.u32 %s52, 1
        %s153 = smul.addr %s152, 8
        %s154 = scalar_lea.vmem [#allocation5], %s153
        // Predicated region
        $region29: #{repmat.1} parent=23 // pred_check
          %p155 = pneg %p62
        $region30: #{repmat.1} parent=23 // pred_check_branch
          %157 = sbr.rel (%p155) target = $region32
        $region31: #{repmat.1} parent=23 // pred_region
          %s159 = ssub.s32 128, 128
          %160 = vsyncadd %s151, %s159
          %s161 = smul.addr %s18, 128
          %s162 = scalar_lea.hbm %s1, %s161
          %s164 = sshll.u32 %s154, 4
          %s165 = int_to_ptr.vmem [resolvable:$true] %s164
          %167 = dma.vmem_to_hbm [thread:$0]  %s165, 128, %s162, %s151
        $region32: #{repmat.1} parent=23 // pred_fallthru
          _
      $region24: #{repmat.1} parent=5 // pred_fallthru
        _
      %p168 = scmp.le.s32.totalorder 2, %s13
      // Predicated region
      $region33: #{repmat.1} parent=5 // pred_check
        %p169 = pneg %p168
      $region34: #{repmat.1} parent=5 // pred_check_branch
        %171 = sbr.rel (%p169) target = $region36
      $region35: #{repmat.1} parent=5 // pred_region
        %s172 = ssub.s32 %s13, 2
        // Predicated region
        $region37: #{repmat.1} parent=35 // pred_check
          %p173 = pneg %p68
        $region38: #{repmat.1} parent=35 // pred_check_branch
          %175 = sbr.rel (%p173) target = $region40
        $region39: #{repmat.1} parent=35 // pred_region
          %s176 = sand.u32 %s53, 1
          %s177 = scalar_lea.sflag [#allocation4], %s176
          %s178 = sand.u32 %s53, 1
          %s179 = smul.addr %s178, 8
          %s180 = scalar_lea.vmem [#allocation5], %s179
          %181 = dma.done %s177, 128
        $region40: #{repmat.1} parent=35 // pred_fallthru
          _
      $region36: #{repmat.1} parent=5 // pred_fallthru
        _
    $region6: #{repmat.1} parent=1 // loop_footer
      %s17 = sadd.s32 1, %s13
    $region7: #{repmat.1} parent=1 // loop_footer_branch
      %12 = sbr.rel target = $region3
    $region8: #{repmat.1} parent=1 // loop_exit
      _
    %182 = vsyncpa [#allocation3], 1
    %s183 = scalar_lea.sflag [#allocation3], 1
    %184 = vsyncpa %s183, 1
    %185 = vsyncpa [#allocation4], 1
    %s186 = scalar_lea.sflag [#allocation4], 1
    %187 = vsyncpa %s186, 1

</llo_original>
